<compile_context>
chip_gen: v5e
topology: v5e:2x2
jax: 0.10.0
libtpu: 0.0.40
codegen_flags: <defaults>
</compile_context>

<pallas_src>
import functools

import jax
import jax.numpy as jnp
from jax.experimental import pallas as pl
from jax.experimental.pallas import tpu as pltpu


_F32_TEMPS = 6            # live (TN, C_pad) f32 temporaries budgeted in-kernel
_TOTAL_VMEM_BUDGET = 36 << 20   # target working set (fits every generation)
_VMEM_LIMIT_CAP = 48 << 20      # safe vs v7x 64 MiB-per-TC physical VMEM


def _round_up(x: int, m: int) -> int:
    return ((x + m - 1) // m) * m


def _choose_tile_rows(n_rows: int, n_cols: int, in_itemsize: int,
                      total_budget_bytes: int = _TOTAL_VMEM_BUDGET,
                      max_rows: int = 65536) -> int:
    """Largest multiple-of-8 row tile whose FULL VMEM footprint fits the budget.

    Footprint per row = C_pad * (2 inputs x 2 pipeline buffers x itemsize
                                 + _F32_TEMPS x 4B f32 temporaries)
    with C_pad = round_up(C, 128) to account for lane padding in VMEM.
    Bigger tiles amortize the ~0.35us per-grid-step overhead; for small C the
    lane padding (not HBM bytes) is what bounds the tile.
    """
    c_pad = _round_up(n_cols, 128)
    bytes_per_row = c_pad * (4 * in_itemsize + _F32_TEMPS * 4)
    rows = total_budget_bytes // bytes_per_row
    rows = max(8, min(int(rows), max_rows))
    rows = (rows // 8) * 8
    rows = min(rows, _round_up(n_rows, 8))
    return max(rows, 8)


def _vmem_limit_bytes(tile_rows: int, n_cols: int, in_itemsize: int) -> int:
    """Explicit scoped-VMEM limit derived from the actual footprint (+25%)."""
    c_pad = _round_up(n_cols, 128)
    pipeline = 4 * tile_rows * c_pad * in_itemsize      # 2 inputs x 2 buffers
    temps = _F32_TEMPS * tile_rows * c_pad * 4          # f32 intermediates
    footprint = pipeline + temps + (64 << 10)
    return int(min(max(footprint * 5 // 4, 32 << 20), _VMEM_LIMIT_CAP))


def _kd_loss_kernel(x_ref, t_ref, o_ref, *,
                    inv_temp: float, n_rows: int, tile_rows: int):
    i = pl.program_id(0)

    inv_t = jnp.float32(inv_temp)
    x = x_ref[...].astype(jnp.float32) * inv_t   # student logits / T   (TN, C)
    t = t_ref[...].astype(jnp.float32) * inv_t   # teacher logits / T   (TN, C)

    # Student log-sum-exp (log_softmax denominator), per row.
    x_max = jnp.max(x, axis=1, keepdims=True)
    x_sh = x - x_max                                                # (TN, C)
    x_lse = jnp.log(jnp.sum(jnp.exp(x_sh), axis=1, keepdims=True))  # (TN, 1)

    # Teacher shifted exponentials, per row.
    t_max = jnp.max(t, axis=1, keepdims=True)
    t_sh = t - t_max                                                # (TN, C)
    t_exp = jnp.exp(t_sh)                                           # (TN, C)
    t_sum = jnp.sum(t_exp, axis=1, keepdims=True)                   # (TN, 1)

    # KL per row without materializing p / log_p / log_q / elt:
    #   sum_c p*(log p - log q)
    # = (1/t_sum) * sum_c t_exp*(t_sh - x_sh) + x_lse - log(t_sum)
    num = jnp.sum(t_exp * (t_sh - x_sh), axis=1, keepdims=True)     # (TN, 1)
    row_loss = (num * pl.reciprocal(t_sum, approx=False)
                + (x_lse - jnp.log(t_sum)))                         # (TN, 1)

    # Ragged last tile: mask only the per-row loss (rows are independent, so
    # padded-garbage rows -- possibly NaN/Inf -- never touch valid rows and
    # are discarded here by the select).
    if (n_rows % tile_rows) != 0:
        row_ids = (i * tile_rows
                   + jax.lax.broadcasted_iota(jnp.int32, (tile_rows, 1), 0))
        row_loss = jnp.where(row_ids < n_rows, row_loss, 0.0)

    partial = jnp.sum(row_loss, axis=0, keepdims=True)              # (1, 1)
    o_ref[...] = partial.reshape(1, 1, 1)


def kd_loss(input_logits: jax.Array, target_logits: jax.Array, T: float,
            tile_rows: int | None = None) -> jax.Array:
    """Pallas TPU implementation of KDLoss(T)(input, target). Returns a scalar.

    Logits may be bf16 in HBM (recommended: halves HBM traffic on this
    mem-bound kernel); the kernel upcasts to f32 internally.
    """
    assert input_logits.shape == target_logits.shape
    assert input_logits.ndim == 2
    N, C = input_logits.shape

    x_isz = jnp.dtype(input_logits.dtype).itemsize
    t_isz = jnp.dtype(target_logits.dtype).itemsize
    in_itemsize = max(x_isz, t_isz)

    if tile_rows is None:
        tn = _choose_tile_rows(N, C, in_itemsize)
    else:
        tn = max(8, (int(tile_rows) // 8) * 8)
        tn = min(tn, _round_up(N, 8))
    grid = pl.cdiv(N, tn)

    kernel = functools.partial(
        _kd_loss_kernel,
        inv_temp=1.0 / float(T),
        n_rows=N, tile_rows=tn)

    cost = pl.CostEstimate(
        flops=8 * N * C,
        transcendentals=2 * N * C,
        bytes_accessed=N * C * (x_isz + t_isz) + grid * 4)

    partials = pl.pallas_call(
        kernel,
        out_shape=jax.ShapeDtypeStruct((grid, 1, 1), jnp.float32),
        grid_spec=pltpu.PrefetchScalarGridSpec(
            num_scalar_prefetch=0,
            grid=(grid,),
            in_specs=[
                pl.BlockSpec((tn, C), lambda i: (i, 0)),
                pl.BlockSpec((tn, C), lambda i: (i, 0)),
            ],
            # Per-tile partial sums -> no cross-step accumulator, row axis can
            # be sharded across TensorCores (v7x megacore).
            out_specs=pl.BlockSpec((1, 1, 1), lambda i: (i, 0, 0)),
        ),
        compiler_params=pltpu.CompilerParams(
            dimension_semantics=("parallel",),
            vmem_limit_bytes=_vmem_limit_bytes(tn, C, in_itemsize)),
        cost_estimate=cost,
    )(input_logits, target_logits)

    scale = jnp.float32(float(T) * float(T) / float(N * C))
    return jnp.sum(partials[:, 0, 0]) * scale


def _kd_loss_ref(input_logits, target_logits, T):
    x = input_logits.astype(jnp.float32) / T
    t = target_logits.astype(jnp.float32) / T
    log_q = jax.nn.log_softmax(x, axis=1)
    p = jax.nn.softmax(t, axis=1)
    log_p = jax.nn.log_softmax(t, axis=1)
    elt = p * (log_p - log_q)
    return jnp.mean(elt) * T * T


if __name__ == "__main__":
    # KDLoss has no learnable parameters; only the temperature T.
    T = 4.0
    key = jax.random.PRNGKey(0)

    # Test 1: small "cell-type annotation" shape, f32, auto tile (single tile).
    N, C = 64, 32
    k1, k2 = jax.random.split(key)
    student = jax.random.normal(k1, (N, C), dtype=jnp.float32)
    teacher = jax.random.normal(k2, (N, C), dtype=jnp.float32)

    loss = kd_loss(student, teacher, T)
    jax.block_until_ready(loss)
    ref = _kd_loss_ref(student, teacher, T)
    assert jnp.allclose(loss, ref, rtol=1e-5, atol=1e-6), (loss, ref)

    # Test 2: bf16 inputs + forced small tile + ragged N -> exercises the
    # multi-tile parallel grid, per-tile partial sums and last-tile masking
    # (padded garbage rows must not leak NaNs).
    N2, C2 = 60, 32
    k3, k4 = jax.random.split(k1)
    student2 = jax.random.normal(k3, (N2, C2), dtype=jnp.float32).astype(jnp.bfloat16)
    teacher2 = jax.random.normal(k4, (N2, C2), dtype=jnp.float32).astype(jnp.bfloat16)

    loss2 = kd_loss(student2, teacher2, T, tile_rows=16)
    jax.block_until_ready(loss2)
    ref2 = _kd_loss_ref(student2, teacher2, T)
    assert jnp.isfinite(loss2), loss2
    assert jnp.allclose(loss2, ref2, rtol=1e-5, atol=1e-5), (loss2, ref2)

    print("KERNEL_OK")
</pallas_src>

<mosaic_0001>
module attributes {stable_mosaic.version = 11 : i64} {
  func.func @_kd_loss_kernel(%arg0: i32, %arg1: memref<64x32xf32, #tpu.memory_space<vmem>>, %arg2: memref<64x32xf32, #tpu.memory_space<vmem>>, %arg3: memref<1x1x1xf32, #tpu.memory_space<vmem>>) attributes {dimension_semantics = [#tpu.dimension_semantics<parallel>], iteration_bounds = array<i64: 1>, scalar_prefetch = 0 : i64, scratch_operands = 0 : i64, tpu.core_type = #tpu.core_type<tc>, window_params = [{transform_indices = @transform_0, window_bounds = array<i64: 64, 32>}, {transform_indices = @transform_1, window_bounds = array<i64: 64, 32>}, {transform_indices = @transform_2, window_bounds = array<i64: 1, 1, 1>}]} {
    %c0 = arith.constant 0 : index
    %c0_0 = arith.constant 0 : index
    %0 = vector.load %arg1[%c0, %c0_0] : memref<64x32xf32, #tpu.memory_space<vmem>>, vector<64x32xf32>
    %cst = arith.constant 2.500000e-01 : f32
    %1 = vector.broadcast %cst : f32 to vector<64x32xf32>
    %2 = arith.mulf %0, %1 : vector<64x32xf32>
    %c0_1 = arith.constant 0 : index
    %c0_2 = arith.constant 0 : index
    %3 = vector.load %arg2[%c0_1, %c0_2] : memref<64x32xf32, #tpu.memory_space<vmem>>, vector<64x32xf32>
    %cst_3 = arith.constant 2.500000e-01 : f32
    %4 = vector.broadcast %cst_3 : f32 to vector<64x32xf32>
    %5 = arith.mulf %3, %4 : vector<64x32xf32>
    %cst_4 = arith.constant dense<0xFF800000> : vector<64xf32>
    %6 = vector.multi_reduction <maximumf>, %2, %cst_4 [1] : vector<64x32xf32> to vector<64xf32>
    %7 = vector.shape_cast %6 : vector<64xf32> to vector<64x1xf32>
    %8 = vector.broadcast %7 : vector<64x1xf32> to vector<64x32xf32>
    %9 = arith.subf %2, %8 : vector<64x32xf32>
    %10 = math.exp %9 : vector<64x32xf32>
    %cst_5 = arith.constant dense<0.000000e+00> : vector<64xf32>
    %11 = vector.multi_reduction <add>, %10, %cst_5 [1] : vector<64x32xf32> to vector<64xf32>
    %12 = vector.shape_cast %11 : vector<64xf32> to vector<64x1xf32>
    %13 = math.log %12 : vector<64x1xf32>
    %cst_6 = arith.constant dense<0xFF800000> : vector<64xf32>
    %14 = vector.multi_reduction <maximumf>, %5, %cst_6 [1] : vector<64x32xf32> to vector<64xf32>
    %15 = vector.shape_cast %14 : vector<64xf32> to vector<64x1xf32>
    %16 = vector.broadcast %15 : vector<64x1xf32> to vector<64x32xf32>
    %17 = arith.subf %5, %16 : vector<64x32xf32>
    %18 = math.exp %17 : vector<64x32xf32>
    %cst_7 = arith.constant dense<0.000000e+00> : vector<64xf32>
    %19 = vector.multi_reduction <add>, %18, %cst_7 [1] : vector<64x32xf32> to vector<64xf32>
    %20 = vector.shape_cast %19 : vector<64xf32> to vector<64x1xf32>
    %21 = arith.subf %17, %9 : vector<64x32xf32>
    %22 = arith.mulf %18, %21 : vector<64x32xf32>
    %cst_8 = arith.constant dense<0.000000e+00> : vector<64xf32>
    %23 = vector.multi_reduction <add>, %22, %cst_8 [1] : vector<64x32xf32> to vector<64xf32>
    %24 = vector.shape_cast %23 : vector<64xf32> to vector<64x1xf32>
    %25 = tpu.reciprocal %20 : vector<64x1xf32> -> vector<64x1xf32>
    %26 = arith.mulf %24, %25 : vector<64x1xf32>
    %27 = math.log %20 : vector<64x1xf32>
    %28 = arith.subf %13, %27 : vector<64x1xf32>
    %29 = arith.addf %26, %28 : vector<64x1xf32>
    %cst_9 = arith.constant dense<0.000000e+00> : vector<1xf32>
    %30 = vector.multi_reduction <add>, %29, %cst_9 [0] : vector<64x1xf32> to vector<1xf32>
    %31 = vector.shape_cast %30 : vector<1xf32> to vector<1x1xf32>
    %32 = vector.shape_cast %31 : vector<1x1xf32> to vector<1x1x1xf32>
    %c0_10 = arith.constant 0 : index
    %c0_11 = arith.constant 0 : index
    %c0_12 = arith.constant 0 : index
    %33 = vector.load %arg3[%c0_10, %c0_11, %c0_12] : memref<1x1x1xf32, #tpu.memory_space<vmem>>, vector<1x1x1xf32>
    tpu.vector_store %arg3[%c0_10, %c0_11, %c0_12], %32 {strides = array<i32>} : memref<1x1x1xf32, #tpu.memory_space<vmem>>, vector<1x1x1xf32>,
    return
  }
  func.func @transform_0(%arg0: i32) -> (i32, i32) {
    %c0_i32 = arith.constant 0 : i32
    %c0_i32_0 = arith.constant 0 : i32
    return %arg0, %c0_i32 : i32, i32
  }
  func.func @transform_1(%arg0: i32) -> (i32, i32) {
    %c0_i32 = arith.constant 0 : i32
    %c0_i32_0 = arith.constant 0 : i32
    return %arg0, %c0_i32 : i32, i32
  }
  func.func @transform_2(%arg0: i32) -> (i32, i32, i32) {
    %c0_i32 = arith.constant 0 : i32
    %c0_i32_0 = arith.constant 0 : i32
    %c0_i32_1 = arith.constant 0 : i32
    return %arg0, %c0_i32, %c0_i32_0 : i32, i32, i32
  }
}

</mosaic_0001>

<llo_original>
// kernel: tpu_custom_call.1
$region0: #{tpu_custom_call.1}
  #allocation0 [shape = 'u32[]', space=smem, size = 0x4, offset = 0x4, fixed_abs, tag = 'smem constant byte address 0x4 - core index']
  #allocation1 [shape = 'u32[72,128]{1,0:T(1,128)}', space=vmem, size = 0x9000, scoped, tag = 'internal scratch']
  %s0 = inlined_call_operand.vmem [shape: f32[64,32], index: 0, kind: input, shape index: {}]
  %s1 = inlined_call_operand.vmem [shape: f32[64,32], index: 1, kind: input, shape index: {}]
  %s2 = inlined_call_operand.hbm [shape: f32[1,1,1], index: 2, kind: output, shape index: {}]
  %s3 = sld [smem:[#allocation0]]
  $region18: #{tpu_custom_call.1} parent=0
    _
  %s5 = ssub.s32 1, %s3
  %s6 = scalar_select 0, %s5, %s3
  $region1: #{tpu_custom_call.1} parent=0
    #allocation2 [shape = 'u8[512]{0}', space=vmem, size = 0x400, scoped, tag = 'output window, operand 0, single buffered']
    #allocation3 [shape = 's32[1]{0}', space=sflag, size = 0x4, scoped, tag = 'scoped memory for tpu_custom_call.1']
    %7 = vsyncpa [#allocation3], 0
    // Predicated region
    $region2: #{tpu_custom_call.1} parent=1 // pred_check
      _
    $region3: #{tpu_custom_call.1} parent=1 // pred_check_branch
      %9 = sbr.rel (0) target = $region5
    $region4: #{tpu_custom_call.1} parent=1 // pred_region
      _
    $region5: #{tpu_custom_call.1} parent=1 // pred_fallthru
      _
    // Predicated region
    $region6: #{tpu_custom_call.1} parent=1 // pred_check
      _
    $region7: #{tpu_custom_call.1} parent=1 // pred_check_branch
      %11 = sbr.rel (0) target = $region9
    $region8: #{tpu_custom_call.1} parent=1 // pred_region
      _
    $region9: #{tpu_custom_call.1} parent=1 // pred_fallthru
      _
    %v12 = vld [vmem:[%s0] sm:$0xff]
    %v13 = vld [vmem:[%s0 + $0x8] sm:$0xff]
    %v14 = vld [vmem:[%s0 + $0x10] sm:$0xff]
    %v15 = vld [vmem:[%s0 + $0x18] sm:$0xff]
    %v16 = vld [vmem:[%s0 + $0x20] sm:$0xff]
    %v17 = vld [vmem:[%s0 + $0x28] sm:$0xff]
    %v18 = vld [vmem:[%s0 + $0x30] sm:$0xff]
    %v19 = vld [vmem:[%s0 + $0x38] sm:$0xff]
    %v20 = vmul.f32 %v12, 0.25
    %v21 = vmul.f32 %v13, 0.25
    %v22 = vmul.f32 %v14, 0.25
    %v23 = vmul.f32 %v15, 0.25
    %v24 = vmul.f32 %v16, 0.25
    %v25 = vmul.f32 %v17, 0.25
    %v26 = vmul.f32 %v18, 0.25
    %v27 = vmul.f32 %v19, 0.25
    %v28 = vld [vmem:[%s1] sm:$0xff]
    %v29 = vld [vmem:[%s1 + $0x8] sm:$0xff]
    %v30 = vld [vmem:[%s1 + $0x10] sm:$0xff]
    %v31 = vld [vmem:[%s1 + $0x18] sm:$0xff]
    %v32 = vld [vmem:[%s1 + $0x20] sm:$0xff]
    %v33 = vld [vmem:[%s1 + $0x28] sm:$0xff]
    %v34 = vld [vmem:[%s1 + $0x30] sm:$0xff]
    %v35 = vld [vmem:[%s1 + $0x38] sm:$0xff]
    %v36 = vmul.f32 %v28, 0.25
    %v37 = vmul.f32 %v29, 0.25
    %v38 = vmul.f32 %v30, 0.25
    %v39 = vmul.f32 %v31, 0.25
    %v40 = vmul.f32 %v32, 0.25
    %v41 = vmul.f32 %v33, 0.25
    %v42 = vmul.f32 %v34, 0.25
    %v43 = vmul.f32 %v35, 0.25
    %vm44 = vcmask 261120
    %v45 = vsel %vm44, %v20, -inf
    %46 = vmax.xlane.f32.xlu0 %v45
    %v47 = vpop.xlane.xlu0 %46
    %v48 = vsel %vm44, %v21, -inf
    %49 = vmax.xlane.f32.xlu0 %v48
    %v50 = vpop.xlane.xlu0 %49
    %v51 = vsel %vm44, %v22, -inf
    %52 = vmax.xlane.f32.xlu0 %v51
    %v53 = vpop.xlane.xlu0 %52
    %v54 = vsel %vm44, %v23, -inf
    %55 = vmax.xlane.f32.xlu0 %v54
    %v56 = vpop.xlane.xlu0 %55
    %v57 = vsel %vm44, %v24, -inf
    %58 = vmax.xlane.f32.xlu0 %v57
    %v59 = vpop.xlane.xlu0 %58
    %v60 = vsel %vm44, %v25, -inf
    %61 = vmax.xlane.f32.xlu0 %v60
    %v62 = vpop.xlane.xlu0 %61
    %v63 = vsel %vm44, %v26, -inf
    %64 = vmax.xlane.f32.xlu0 %v63
    %v65 = vpop.xlane.xlu0 %64
    %v66 = vsel %vm44, %v27, -inf
    %67 = vmax.xlane.f32.xlu0 %v66
    %v68 = vpop.xlane.xlu0 %67
    %v69 = vsub.f32 %v20, %v47
    %v70 = vsub.f32 %v21, %v50
    %v71 = vsub.f32 %v22, %v53
    %v72 = vsub.f32 %v23, %v56
    %v73 = vsub.f32 %v24, %v59
    %v74 = vsub.f32 %v25, %v62
    %v75 = vsub.f32 %v26, %v65
    %v76 = vsub.f32 %v27, %v68
    %v77 = vmul.f32 %v69, 1.442695
    %v78 = vpow.pop %v77
    %v79 = vmul.f32 %v70, 1.442695
    %v80 = vpow.pop %v79
    %v81 = vmul.f32 %v71, 1.442695
    %v82 = vpow.pop %v81
    %v83 = vmul.f32 %v72, 1.442695
    %v84 = vpow.pop %v83
    %v85 = vmul.f32 %v73, 1.442695
    %v86 = vpow.pop %v85
    %v87 = vmul.f32 %v74, 1.442695
    %v88 = vpow.pop %v87
    %v89 = vmul.f32 %v75, 1.442695
    %v90 = vpow.pop %v89
    %v91 = vmul.f32 %v76, 1.442695
    %v92 = vpow.pop %v91
    %v93 = vsel %vm44, %v78, 0.0
    %94 = vadd.xlane.f32.xlu0 %v93
    %v95 = vpop.xlane.xlu0 %94
    %v96 = vsel %vm44, %v80, 0.0
    %97 = vadd.xlane.f32.xlu0 %v96
    %v98 = vpop.xlane.xlu0 %97
    %v99 = vsel %vm44, %v82, 0.0
    %100 = vadd.xlane.f32.xlu0 %v99
    %v101 = vpop.xlane.xlu0 %100
    %v102 = vsel %vm44, %v84, 0.0
    %103 = vadd.xlane.f32.xlu0 %v102
    %v104 = vpop.xlane.xlu0 %103
    %v105 = vsel %vm44, %v86, 0.0
    %106 = vadd.xlane.f32.xlu0 %v105
    %v107 = vpop.xlane.xlu0 %106
    %v108 = vsel %vm44, %v88, 0.0
    %109 = vadd.xlane.f32.xlu0 %v108
    %v110 = vpop.xlane.xlu0 %109
    %v111 = vsel %vm44, %v90, 0.0
    %112 = vadd.xlane.f32.xlu0 %v111
    %v113 = vpop.xlane.xlu0 %112
    %v114 = vsel %vm44, %v92, 0.0
    %115 = vadd.xlane.f32.xlu0 %v114
    %v116 = vpop.xlane.xlu0 %115
    %v117 = vlog2.pop %v95
    %v118 = vmul.f32 %v117, 0.6931472
    %v119 = vlog2.pop %v98
    %v120 = vmul.f32 %v119, 0.6931472
    %v121 = vlog2.pop %v101
    %v122 = vmul.f32 %v121, 0.6931472
    %v123 = vlog2.pop %v104
    %v124 = vmul.f32 %v123, 0.6931472
    %v125 = vlog2.pop %v107
    %v126 = vmul.f32 %v125, 0.6931472
    %v127 = vlog2.pop %v110
    %v128 = vmul.f32 %v127, 0.6931472
    %v129 = vlog2.pop %v113
    %v130 = vmul.f32 %v129, 0.6931472
    %v131 = vlog2.pop %v116
    %v132 = vmul.f32 %v131, 0.6931472
    %v133 = vsel %vm44, %v36, -inf
    %134 = vmax.xlane.f32.xlu0 %v133
    %v135 = vpop.xlane.xlu0 %134
    %v136 = vsel %vm44, %v37, -inf
    %137 = vmax.xlane.f32.xlu0 %v136
    %v138 = vpop.xlane.xlu0 %137
    %v139 = vsel %vm44, %v38, -inf
    %140 = vmax.xlane.f32.xlu0 %v139
    %v141 = vpop.xlane.xlu0 %140
    %v142 = vsel %vm44, %v39, -inf
    %143 = vmax.xlane.f32.xlu0 %v142
    %v144 = vpop.xlane.xlu0 %143
    %v145 = vsel %vm44, %v40, -inf
    %146 = vmax.xlane.f32.xlu0 %v145
    %v147 = vpop.xlane.xlu0 %146
    %v148 = vsel %vm44, %v41, -inf
    %149 = vmax.xlane.f32.xlu0 %v148
    %v150 = vpop.xlane.xlu0 %149
    %v151 = vsel %vm44, %v42, -inf
    %152 = vmax.xlane.f32.xlu0 %v151
    %v153 = vpop.xlane.xlu0 %152
    %v154 = vsel %vm44, %v43, -inf
    %155 = vmax.xlane.f32.xlu0 %v154
    %v156 = vpop.xlane.xlu0 %155
    %v157 = vsub.f32 %v36, %v135
    %v158 = vsub.f32 %v37, %v138
    %v159 = vsub.f32 %v38, %v141
    %v160 = vsub.f32 %v39, %v144
    %v161 = vsub.f32 %v40, %v147
    %v162 = vsub.f32 %v41, %v150
    %v163 = vsub.f32 %v42, %v153
    %v164 = vsub.f32 %v43, %v156
    %v165 = vmul.f32 %v157, 1.442695
    %v166 = vpow.pop %v165
    %v167 = vmul.f32 %v158, 1.442695
    %v168 = vpow.pop %v167
    %v169 = vmul.f32 %v159, 1.442695
    %v170 = vpow.pop %v169
    %v171 = vmul.f32 %v160, 1.442695
    %v172 = vpow.pop %v171
    %v173 = vmul.f32 %v161, 1.442695
    %v174 = vpow.pop %v173
    %v175 = vmul.f32 %v162, 1.442695
    %v176 = vpow.pop %v175
    %v177 = vmul.f32 %v163, 1.442695
    %v178 = vpow.pop %v177
    %v179 = vmul.f32 %v164, 1.442695
    %v180 = vpow.pop %v179
    %v181 = vsel %vm44, %v166, 0.0
    %182 = vadd.xlane.f32.xlu0 %v181
    %v183 = vpop.xlane.xlu0 %182
    %v184 = vsel %vm44, %v168, 0.0
    %185 = vadd.xlane.f32.xlu0 %v184
    %v186 = vpop.xlane.xlu0 %185
    %v187 = vsel %vm44, %v170, 0.0
    %188 = vadd.xlane.f32.xlu0 %v187
    %v189 = vpop.xlane.xlu0 %188
    %v190 = vsel %vm44, %v172, 0.0
    %191 = vadd.xlane.f32.xlu0 %v190
    %v192 = vpop.xlane.xlu0 %191
    %v193 = vsel %vm44, %v174, 0.0
    %194 = vadd.xlane.f32.xlu0 %v193
    %v195 = vpop.xlane.xlu0 %194
    %v196 = vsel %vm44, %v176, 0.0
    %197 = vadd.xlane.f32.xlu0 %v196
    %v198 = vpop.xlane.xlu0 %197
    %v199 = vsel %vm44, %v178, 0.0
    %200 = vadd.xlane.f32.xlu0 %v199
    %v201 = vpop.xlane.xlu0 %200
    %v202 = vsel %vm44, %v180, 0.0
    %203 = vadd.xlane.f32.xlu0 %v202
    %v204 = vpop.xlane.xlu0 %203
    %v205 = vsub.f32 %v157, %v69
    %v206 = vsub.f32 %v158, %v70
    %v207 = vsub.f32 %v159, %v71
    %v208 = vsub.f32 %v160, %v72
    %v209 = vsub.f32 %v161, %v73
    %v210 = vsub.f32 %v162, %v74
    %v211 = vsub.f32 %v163, %v75
    %v212 = vsub.f32 %v164, %v76
    %v213 = vmul.f32 %v166, %v205
    %v214 = vmul.f32 %v168, %v206
    %v215 = vmul.f32 %v170, %v207
    %v216 = vmul.f32 %v172, %v208
    %v217 = vmul.f32 %v174, %v209
    %v218 = vmul.f32 %v176, %v210
    %v219 = vmul.f32 %v178, %v211
    %v220 = vmul.f32 %v180, %v212
    %v221 = vsel %vm44, %v213, 0.0
    %222 = vadd.xlane.f32.xlu0 %v221
    %v223 = vpop.xlane.xlu0 %222
    %v224 = vsel %vm44, %v214, 0.0
    %225 = vadd.xlane.f32.xlu0 %v224
    %v226 = vpop.xlane.xlu0 %225
    %v227 = vsel %vm44, %v215, 0.0
    %228 = vadd.xlane.f32.xlu0 %v227
    %v229 = vpop.xlane.xlu0 %228
    %v230 = vsel %vm44, %v216, 0.0
    %231 = vadd.xlane.f32.xlu0 %v230
    %v232 = vpop.xlane.xlu0 %231
    %v233 = vsel %vm44, %v217, 0.0
    %234 = vadd.xlane.f32.xlu0 %v233
    %v235 = vpop.xlane.xlu0 %234
    %v236 = vsel %vm44, %v218, 0.0
    %237 = vadd.xlane.f32.xlu0 %v236
    %v238 = vpop.xlane.xlu0 %237
    %v239 = vsel %vm44, %v219, 0.0
    %240 = vadd.xlane.f32.xlu0 %v239
    %v241 = vpop.xlane.xlu0 %240
    %v242 = vsel %vm44, %v220, 0.0
    %243 = vadd.xlane.f32.xlu0 %v242
    %v244 = vpop.xlane.xlu0 %243
    %v245 = vrcp.pop %v183
    %v246 = vmul.f32 %v183, %v245
    %v247 = vsub.f32 1.0, %v246
    %v248 = vmul.f32 %v245, %v247
    %v249 = vadd.f32 %v245, %v248
    %vm250 = vweird.f32 %v183
    %vm251 = vweird.f32 %v245
    %vm252 = vmor %vm250, %vm251
    %v253 = vsel %vm252, %v245, %v249
    %v254 = vand.u32 2147483647, %v183
    %vm255 = vcmp.eq.f32.partialorder %v254, 8.507059e+37
    %v256 = vand.u32 %v183, 2147483648
    %v257 = vor.u32 1.1754944e-38, %v256
    %v258 = vsel %vm255, %v257, %v253
    %v259 = vrcp.pop %v186
    %v260 = vmul.f32 %v186, %v259
    %v261 = vsub.f32 1.0, %v260
    %v262 = vmul.f32 %v259, %v261
    %v263 = vadd.f32 %v259, %v262
    %vm264 = vweird.f32 %v186
    %vm265 = vweird.f32 %v259
    %vm266 = vmor %vm264, %vm265
    %v267 = vsel %vm266, %v259, %v263
    %v268 = vand.u32 2147483647, %v186
    %vm269 = vcmp.eq.f32.partialorder %v268, 8.507059e+37
    %v270 = vand.u32 %v186, 2147483648
    %v271 = vor.u32 1.1754944e-38, %v270
    %v272 = vsel %vm269, %v271, %v267
    %v273 = vrcp.pop %v189
    %v274 = vmul.f32 %v189, %v273
    %v275 = vsub.f32 1.0, %v274
    %v276 = vmul.f32 %v273, %v275
    %v277 = vadd.f32 %v273, %v276
    %vm278 = vweird.f32 %v189
    %vm279 = vweird.f32 %v273
    %vm280 = vmor %vm278, %vm279
    %v281 = vsel %vm280, %v273, %v277
    %v282 = vand.u32 2147483647, %v189
    %vm283 = vcmp.eq.f32.partialorder %v282, 8.507059e+37
    %v284 = vand.u32 %v189, 2147483648
    %v285 = vor.u32 1.1754944e-38, %v284
    %v286 = vsel %vm283, %v285, %v281
    %v287 = vrcp.pop %v192
    %v288 = vmul.f32 %v192, %v287
    %v289 = vsub.f32 1.0, %v288
    %v290 = vmul.f32 %v287, %v289
    %v291 = vadd.f32 %v287, %v290
    %vm292 = vweird.f32 %v192
    %vm293 = vweird.f32 %v287
    %vm294 = vmor %vm292, %vm293
    %v295 = vsel %vm294, %v287, %v291
    %v296 = vand.u32 2147483647, %v192
    %vm297 = vcmp.eq.f32.partialorder %v296, 8.507059e+37
    %v298 = vand.u32 %v192, 2147483648
    %v299 = vor.u32 1.1754944e-38, %v298
    %v300 = vsel %vm297, %v299, %v295
    %v301 = vrcp.pop %v195
    %v302 = vmul.f32 %v195, %v301
    %v303 = vsub.f32 1.0, %v302
    %v304 = vmul.f32 %v301, %v303
    %v305 = vadd.f32 %v301, %v304
    %vm306 = vweird.f32 %v195
    %vm307 = vweird.f32 %v301
    %vm308 = vmor %vm306, %vm307
    %v309 = vsel %vm308, %v301, %v305
    %v310 = vand.u32 2147483647, %v195
    %vm311 = vcmp.eq.f32.partialorder %v310, 8.507059e+37
    %v312 = vand.u32 %v195, 2147483648
    %v313 = vor.u32 1.1754944e-38, %v312
    %v314 = vsel %vm311, %v313, %v309
    %v315 = vrcp.pop %v198
    %v316 = vmul.f32 %v198, %v315
    %v317 = vsub.f32 1.0, %v316
    %v318 = vmul.f32 %v315, %v317
    %v319 = vadd.f32 %v315, %v318
    %vm320 = vweird.f32 %v198
    %vm321 = vweird.f32 %v315
    %vm322 = vmor %vm320, %vm321
    %v323 = vsel %vm322, %v315, %v319
    %v324 = vand.u32 2147483647, %v198
    %vm325 = vcmp.eq.f32.partialorder %v324, 8.507059e+37
    %v326 = vand.u32 %v198, 2147483648
    %v327 = vor.u32 1.1754944e-38, %v326
    %v328 = vsel %vm325, %v327, %v323
    %v329 = vrcp.pop %v201
    %v330 = vmul.f32 %v201, %v329
    %v331 = vsub.f32 1.0, %v330
    %v332 = vmul.f32 %v329, %v331
    %v333 = vadd.f32 %v329, %v332
    %vm334 = vweird.f32 %v201
    %vm335 = vweird.f32 %v329
    %vm336 = vmor %vm334, %vm335
    %v337 = vsel %vm336, %v329, %v333
    %v338 = vand.u32 2147483647, %v201
    %vm339 = vcmp.eq.f32.partialorder %v338, 8.507059e+37
    %v340 = vand.u32 %v201, 2147483648
    %v341 = vor.u32 1.1754944e-38, %v340
    %v342 = vsel %vm339, %v341, %v337
    %v343 = vrcp.pop %v204
    %v344 = vmul.f32 %v204, %v343
    %v345 = vsub.f32 1.0, %v344
    %v346 = vmul.f32 %v343, %v345
    %v347 = vadd.f32 %v343, %v346
    %vm348 = vweird.f32 %v204
    %vm349 = vweird.f32 %v343
    %vm350 = vmor %vm348, %vm349
    %v351 = vsel %vm350, %v343, %v347
    %v352 = vand.u32 2147483647, %v204
    %vm353 = vcmp.eq.f32.partialorder %v352, 8.507059e+37
    %v354 = vand.u32 %v204, 2147483648
    %v355 = vor.u32 1.1754944e-38, %v354
    %v356 = vsel %vm353, %v355, %v351
    %v357 = vmul.f32 %v223, %v258
    %v358 = vmul.f32 %v226, %v272
    %v359 = vmul.f32 %v229, %v286
    %v360 = vmul.f32 %v232, %v300
    %v361 = vmul.f32 %v235, %v314
    %v362 = vmul.f32 %v238, %v328
    %v363 = vmul.f32 %v241, %v342
    %v364 = vmul.f32 %v244, %v356
    %v365 = vlog2.pop %v183
    %v366 = vmul.f32 %v365, 0.6931472
    %v367 = vlog2.pop %v186
    %v368 = vmul.f32 %v367, 0.6931472
    %v369 = vlog2.pop %v189
    %v370 = vmul.f32 %v369, 0.6931472
    %v371 = vlog2.pop %v192
    %v372 = vmul.f32 %v371, 0.6931472
    %v373 = vlog2.pop %v195
    %v374 = vmul.f32 %v373, 0.6931472
    %v375 = vlog2.pop %v198
    %v376 = vmul.f32 %v375, 0.6931472
    %v377 = vlog2.pop %v201
    %v378 = vmul.f32 %v377, 0.6931472
    %v379 = vlog2.pop %v204
    %v380 = vmul.f32 %v379, 0.6931472
    %v381 = vsub.f32 %v118, %v366
    %v382 = vsub.f32 %v120, %v368
    %v383 = vsub.f32 %v122, %v370
    %v384 = vsub.f32 %v124, %v372
    %v385 = vsub.f32 %v126, %v374
    %v386 = vsub.f32 %v128, %v376
    %v387 = vsub.f32 %v130, %v378
    %v388 = vsub.f32 %v132, %v380
    %v389 = vadd.f32 %v357, %v381
    %v390 = vadd.f32 %v358, %v382
    %v391 = vadd.f32 %v359, %v383
    %v392 = vadd.f32 %v360, %v384
    %v393 = vadd.f32 %v361, %v385
    %v394 = vadd.f32 %v362, %v386
    %v395 = vadd.f32 %v363, %v387
    %v396 = vadd.f32 %v364, %v388
    %v397 = vadd.f32 %v389, %v390
    %v398 = vadd.f32 %v397, %v391
    %v399 = vadd.f32 %v398, %v392
    %v400 = vadd.f32 %v399, %v393
    %v401 = vadd.f32 %v400, %v394
    %v402 = vadd.f32 %v401, %v395
    %v403 = vadd.f32 %v402, %v396
    %v404 = vrot.slane %v403, 4
    %v405 = vadd.f32 %v403, %v404
    %v406 = vrot.slane %v405, 2
    %v407 = vadd.f32 %v405, %v406
    %v408 = vrot.slane %v407, 1
    %v409 = vadd.f32 %v407, %v408
    %vm410 = vcmask 0
    %411 = vst.msk [vmem:[#allocation2] sm:$0x1] %vm410, %v409
    // Predicated region
    $region10: #{tpu_custom_call.1} parent=1 // pred_check
      _
    $region11: #{tpu_custom_call.1} parent=1 // pred_check_branch
      %413 = sbr.rel (0) target = $region13
    $region12: #{tpu_custom_call.1} parent=1 // pred_region
      %415 = vsyncadd [#allocation3], 0
      %s417 = sshll.u32 [#allocation2], 4
      %s418 = int_to_ptr.vmem [resolvable:$true] %s417
      %s419 = sshll.u32 %s2, 4
      %s420 = int_to_ptr.hbm [resolvable:$true] %s419
      %422 = dma.vmem_to_hbm [thread:$0]  %s418, 16, %s420, [#allocation3]
    $region13: #{tpu_custom_call.1} parent=1 // pred_fallthru
      _
    // Predicated region
    $region14: #{tpu_custom_call.1} parent=1 // pred_check
      _
    $region15: #{tpu_custom_call.1} parent=1 // pred_check_branch
      %424 = sbr.rel (0) target = $region17
    $region16: #{tpu_custom_call.1} parent=1 // pred_region
      %426 = dma.done [#allocation3], 16
    $region17: #{tpu_custom_call.1} parent=1 // pred_fallthru
      _
    %427 = vsyncpa [#allocation3], 1

</llo_original>
